<compile_context>
chip_gen: v7x
topology: tpu7x:2x2x1
jax: 0.10.0
libtpu: 0.0.40
codegen_flags: <defaults>
</compile_context>

<pallas_src>
import functools

import jax
import jax.numpy as jnp
from jax.experimental import pallas as pl
from jax.experimental.pallas import tpu as pltpu


def _resblock_kernel(x_ref, wb1_ref, wb2_ref, proj_ref, p_ref, o_ref):
    R, L = x_ref.shape            # R = H rows, L = N*W*C lanes (128 wide)
    eps = 1e-5

    proj = proj_ref[...]          # (L, L) channel-average projection (1/cnt folded in)
    p = p_ref[...]                # (6, L) packed lane-wide params
    b1_l, b2_l = p[0:1, :], p[1:2, :]
    g1_l, beta1_l = p[2:3, :], p[3:4, :]
    g2_l, beta2_l = p[4:5, :], p[5:6, :]

    row_ids = jax.lax.broadcasted_iota(jnp.int32, (R, L), 0)
    is_top = row_ids == 0
    is_bot = row_ids == R - 1

    def conv3x3(v, wb_ref, bias_l):
        # Three independent (R, L) @ (L, L) MXU matmuls (one per ky tap);
        # ky = +/-1 row halo via sublane roll + boundary mask (SAME padding
        # along H), which keeps the halo off the MXU critical path.
        lhs = v.astype(wb_ref.dtype)
        a = jnp.dot(lhs, wb_ref[0], preferred_element_type=jnp.float32)  # ky=0
        b = jnp.dot(lhs, wb_ref[1], preferred_element_type=jnp.float32)  # ky=1
        c = jnp.dot(lhs, wb_ref[2], preferred_element_type=jnp.float32)  # ky=2
        a = jnp.where(is_top, 0.0, pltpu.roll(a, 1, 0))       # out[h] += a[h-1]
        c = jnp.where(is_bot, 0.0, pltpu.roll(c, R - 1, 0))   # out[h] += c[h+1]
        return a + b + c + bias_l

    def batchnorm(v, g_l, beta_l):
        # Training-mode BatchNorm2d: fused sum / sum-of-squares pass, then a
        # per-channel average + lane broadcast through one projection matmul
        # each (mean, E[x^2]).  All f32; biased variance; eps = 1e-5.
        s1 = jnp.sum(v, axis=0, keepdims=True)        # (1, L)
        s2 = jnp.sum(v * v, axis=0, keepdims=True)    # (1, L)
        mean_l = jnp.dot(s1, proj, preferred_element_type=jnp.float32)
        ex2_l = jnp.dot(s2, proj, preferred_element_type=jnp.float32)
        var_l = ex2_l - mean_l * mean_l
        inv_l = jax.lax.rsqrt(var_l + eps)            # EUP
        scale_l = g_l * inv_l
        return (v - mean_l) * scale_l + beta_l

    x2d = x_ref[...]                                  # (R, L) f32

    # upper_layers: conv1 -> relu -> bn1 -> conv2
    y = conv3x3(x2d, wb1_ref, b1_l)
    y = jnp.maximum(y, 0.0)
    y = batchnorm(y, g1_l, beta1_l)
    z = conv3x3(y, wb2_ref, b2_l)

    # residual add, then lower_layers: relu -> bn2
    out = jnp.maximum(z + x2d, 0.0)
    out = batchnorm(out, g2_l, beta2_l)

    o_ref[...] = out.astype(o_ref.dtype)


def _band_weight(wt_hwio, N, W, C, dtype):
    """(3,3,C,C) HWIO conv weight -> (3, N*W*C, N*W*C) per-ky banded blocks.

    blk[ky][n*W*C + wi*C + ci, n*W*C + wo*C + co] = wt[ky, kx, ci, co] with
    kx = wi - wo + 1 when 0 <= kx < 3; out-of-range kx taps (SAME zero padding
    along W) vanish, and the kron with eye(N) keeps images independent inside
    the lane axis.
    """
    wt = wt_hwio.astype(jnp.float32)
    eye_n = jnp.eye(N, dtype=jnp.float32)
    blocks = []
    for ky in range(3):
        blk = jnp.zeros((W * C, W * C), jnp.float32)
        for kx in range(3):
            shift = jnp.eye(W, W, k=1 - kx, dtype=jnp.float32)  # wi == wo+kx-1
            blk = blk + jnp.kron(shift, wt[ky, kx])
        blocks.append(jnp.kron(eye_n, blk))
    return jnp.stack(blocks, axis=0).astype(dtype)


@functools.partial(jax.jit, static_argnames=("conv_dtype",))
def resblock_forward(x_nchw, params, conv_dtype=jnp.float32):
    """Pallas ResBlock forward.  x_nchw: (N, C, H, W) -> (N, C, H, W).

    conv_dtype=jnp.bfloat16 feeds the conv MXU matmuls bf16 operands with f32
    accumulate (fewer MXU passes; valid on v5e/v6e/v7x).  Default f32 keeps
    exact PyTorch Conv2d float32 semantics.  BN / ReLU / residual math is
    always f32 (no bf16 VPU/EUP paths, which v5e lacks).
    """
    w1, b1, g1, beta1, w2, b2, g2, beta2 = params
    N, C, H, W = x_nchw.shape
    L = N * W * C

    # NCHW -> lane-dense (H, N*W*C) with lane order (n, w, c).
    x_flat = (jnp.transpose(x_nchw, (2, 0, 3, 1))     # (H, N, W, C)
              .reshape(H, L).astype(jnp.float32))

    wb1 = _band_weight(w1, N, W, C, conv_dtype)       # (3, L, L)
    wb2 = _band_weight(w2, N, W, C, conv_dtype)

    def lane_row(v):                                  # (C,) -> (1, L) as (n, w, c)
        return jnp.tile(v.astype(jnp.float32), N * W).reshape(1, L)

    packed = jnp.concatenate(
        [lane_row(b1), lane_row(b2), lane_row(g1), lane_row(beta1),
         lane_row(g2), lane_row(beta2)], axis=0)      # (6, L)

    # proj[l, l'] = [channel(l) == channel(l')] / (N*H*W)   (1/cnt is 2^-k exact here)
    sel = jnp.tile(jnp.eye(C, dtype=jnp.float32), (N * W, 1))      # (L, C)
    proj = (sel @ sel.T) * (1.0 / float(N * H * W))                # (L, L)

    vmem = pl.BlockSpec(memory_space=pltpu.MemorySpace.VMEM)
    out2d = pl.pallas_call(
        _resblock_kernel,
        out_shape=jax.ShapeDtypeStruct((H, L), jnp.float32),
        in_specs=[vmem] * 5,
        out_specs=vmem,
    )(x_flat, wb1, wb2, proj, packed)

    # (H, N, W, C) -> (N, C, H, W)
    return jnp.transpose(out2d.reshape(H, N, W, C), (1, 3, 0, 2))


def resblock_reference(x_nchw, params):
    """Pure-JAX reference (same math), used only for a correctness check."""
    w1, b1, g1, beta1, w2, b2, g2, beta2 = params
    x = jnp.transpose(x_nchw, (0, 2, 3, 1)).astype(jnp.float32)

    def conv(v, w, b):
        y = jax.lax.conv_general_dilated(
            v, w, window_strides=(1, 1), padding="SAME",
            dimension_numbers=("NHWC", "HWIO", "NHWC"))
        return y + b.reshape(1, 1, 1, -1)

    def bn(v, g, beta, eps=1e-5):
        mean = jnp.mean(v, axis=(0, 1, 2), keepdims=True)
        var = jnp.mean((v - mean) ** 2, axis=(0, 1, 2), keepdims=True)
        return ((v - mean) * jax.lax.rsqrt(var + eps)
                * g.reshape(1, 1, 1, -1) + beta.reshape(1, 1, 1, -1))

    z = conv(x, w1, b1)
    z = jnp.maximum(z, 0.0)
    z = bn(z, g1, beta1)
    z = conv(z, w2, b2)
    z_prim = z + x
    out = jnp.maximum(z_prim, 0.0)
    out = bn(out, g2, beta2)
    return jnp.transpose(out, (0, 3, 1, 2))


if __name__ == "__main__":
    N, C, H, W = 2, 4, 16, 16  # in_features = 4

    key = jax.random.PRNGKey(0)
    ks = jax.random.split(key, 5)
    x = jax.random.normal(ks[0], (N, C, H, W), jnp.float32)

    # Conv weights in HWIO layout (ky, kx, c_in, c_out); deterministic init.
    w1 = jax.random.normal(ks[1], (3, 3, C, C), jnp.float32) * 0.2
    b1 = jax.random.normal(ks[2], (C,), jnp.float32) * 0.1
    w2 = jax.random.normal(ks[3], (3, 3, C, C), jnp.float32) * 0.2
    b2 = jax.random.normal(ks[4], (C,), jnp.float32) * 0.1
    # BatchNorm2d default affine init: gamma=1, beta=0.
    g1 = jnp.ones((C,), jnp.float32)
    beta1 = jnp.zeros((C,), jnp.float32)
    g2 = jnp.ones((C,), jnp.float32)
    beta2 = jnp.zeros((C,), jnp.float32)

    params = (w1, b1, g1, beta1, w2, b2, g2, beta2)

    ref = jax.block_until_ready(resblock_reference(x, params))

    # f32 path: exact PyTorch float32 conv semantics.
    out = jax.block_until_ready(resblock_forward(x, params))
    assert out.shape == (N, C, H, W)
    max_err = float(jnp.max(jnp.abs(out - ref)))
    assert jnp.allclose(out, ref, atol=1e-3, rtol=1e-3), max_err

    # bf16 MXU-operand path (v5e/v6e/v7x): conv matmuls bf16, f32 accumulate.
    # Looser tolerance — bf16 changes conv numerics.
    out_bf16 = jax.block_until_ready(
        resblock_forward(x, params, conv_dtype=jnp.bfloat16))
    err_bf16 = float(jnp.max(jnp.abs(out_bf16 - ref)))
    assert jnp.allclose(out_bf16, ref, atol=1e-1, rtol=1e-1), err_bf16

    print("KERNEL_OK")
</pallas_src>

<mosaic_0001>
module attributes {stable_mosaic.version = 11 : i64} {
  func.func @_resblock_kernel(%arg0: memref<16x128xf32, #tpu.memory_space<vmem>>, %arg1: memref<3x128x128xf32, #tpu.memory_space<vmem>>, %arg2: memref<3x128x128xf32, #tpu.memory_space<vmem>>, %arg3: memref<128x128xf32, #tpu.memory_space<vmem>>, %arg4: memref<6x128xf32, #tpu.memory_space<vmem>>, %arg5: memref<16x128xf32, #tpu.memory_space<vmem>>) attributes {dimension_semantics = [], scalar_prefetch = 0 : i64, scratch_operands = 0 : i64, tpu.core_type = #tpu.core_type<tc>} {
    %c0 = arith.constant 0 : index
    %c0_0 = arith.constant 0 : index
    %0 = vector.load %arg3[%c0, %c0_0] : memref<128x128xf32, #tpu.memory_space<vmem>>, vector<128x128xf32>
    %c0_1 = arith.constant 0 : index
    %c0_2 = arith.constant 0 : index
    %1 = vector.load %arg4[%c0_1, %c0_2] : memref<6x128xf32, #tpu.memory_space<vmem>>, vector<6x128xf32>
    %2 = vector.extract_strided_slice %1 {offsets = [0, 0], sizes = [1, 128], strides = [1, 1]} : vector<6x128xf32> to vector<1x128xf32>
    %3 = vector.extract_strided_slice %1 {offsets = [1, 0], sizes = [1, 128], strides = [1, 1]} : vector<6x128xf32> to vector<1x128xf32>
    %4 = vector.extract_strided_slice %1 {offsets = [2, 0], sizes = [1, 128], strides = [1, 1]} : vector<6x128xf32> to vector<1x128xf32>
    %5 = vector.extract_strided_slice %1 {offsets = [3, 0], sizes = [1, 128], strides = [1, 1]} : vector<6x128xf32> to vector<1x128xf32>
    %6 = vector.extract_strided_slice %1 {offsets = [4, 0], sizes = [1, 128], strides = [1, 1]} : vector<6x128xf32> to vector<1x128xf32>
    %7 = vector.extract_strided_slice %1 {offsets = [5, 0], sizes = [1, 128], strides = [1, 1]} : vector<6x128xf32> to vector<1x128xf32>
    %8 = tpu.iota {dimensions = array<i32: 0>} : vector<16x128xi32>
    %c0_i32 = arith.constant 0 : i32
    %9 = vector.broadcast %c0_i32 : i32 to vector<16x128xi32>
    %10 = arith.cmpi eq, %8, %9 : vector<16x128xi32>
    %c15_i32 = arith.constant 15 : i32
    %11 = vector.broadcast %c15_i32 : i32 to vector<16x128xi32>
    %12 = arith.cmpi eq, %8, %11 : vector<16x128xi32>
    %c0_3 = arith.constant 0 : index
    %c0_4 = arith.constant 0 : index
    %13 = vector.load %arg0[%c0_3, %c0_4] : memref<16x128xf32, #tpu.memory_space<vmem>>, vector<16x128xf32>
    %c0_5 = arith.constant 0 : index
    %c0_6 = arith.constant 0 : index
    %c0_7 = arith.constant 0 : index
    %14 = vector.load %arg1[%c0_5, %c0_6, %c0_7] : memref<3x128x128xf32, #tpu.memory_space<vmem>>, vector<1x128x128xf32>
    %15 = vector.shape_cast %14 : vector<1x128x128xf32> to vector<128x128xf32>
    %cst = arith.constant dense<0.000000e+00> : vector<16x128xf32>
    %16 = tpu.matmul %13, %15, %cst {dimension_numbers = #tpu.dot_dimension_numbers<[1], [0], [0], [1], [0, 0, 1, 1], [], []>} : vector<16x128xf32>, vector<128x128xf32>, vector<16x128xf32> -> vector<16x128xf32>
    %c1 = arith.constant 1 : index
    %c0_8 = arith.constant 0 : index
    %c0_9 = arith.constant 0 : index
    %17 = vector.load %arg1[%c1, %c0_8, %c0_9] : memref<3x128x128xf32, #tpu.memory_space<vmem>>, vector<1x128x128xf32>
    %18 = vector.shape_cast %17 : vector<1x128x128xf32> to vector<128x128xf32>
    %cst_10 = arith.constant dense<0.000000e+00> : vector<16x128xf32>
    %19 = tpu.matmul %13, %18, %cst_10 {dimension_numbers = #tpu.dot_dimension_numbers<[1], [0], [0], [1], [0, 0, 1, 1], [], []>} : vector<16x128xf32>, vector<128x128xf32>, vector<16x128xf32> -> vector<16x128xf32>
    %c2 = arith.constant 2 : index
    %c0_11 = arith.constant 0 : index
    %c0_12 = arith.constant 0 : index
    %20 = vector.load %arg1[%c2, %c0_11, %c0_12] : memref<3x128x128xf32, #tpu.memory_space<vmem>>, vector<1x128x128xf32>
    %21 = vector.shape_cast %20 : vector<1x128x128xf32> to vector<128x128xf32>
    %cst_13 = arith.constant dense<0.000000e+00> : vector<16x128xf32>
    %22 = tpu.matmul %13, %21, %cst_13 {dimension_numbers = #tpu.dot_dimension_numbers<[1], [0], [0], [1], [0, 0, 1, 1], [], []>} : vector<16x128xf32>, vector<128x128xf32>, vector<16x128xf32> -> vector<16x128xf32>
    %c1_i32 = arith.constant 1 : i32
    %23 = tpu.dynamic_rotate %16 by %c1_i32 dim 0 : vector<16x128xf32>, i32 -> vector<16x128xf32>
    %cst_14 = arith.constant 0.000000e+00 : f32
    %24 = vector.broadcast %cst_14 : f32 to vector<16x128xf32>
    %25 = arith.select %10, %24, %23 : vector<16x128xi1>, vector<16x128xf32>
    %c15_i32_15 = arith.constant 15 : i32
    %26 = tpu.dynamic_rotate %22 by %c15_i32_15 dim 0 : vector<16x128xf32>, i32 -> vector<16x128xf32>
    %cst_16 = arith.constant 0.000000e+00 : f32
    %27 = vector.broadcast %cst_16 : f32 to vector<16x128xf32>
    %28 = arith.select %12, %27, %26 : vector<16x128xi1>, vector<16x128xf32>
    %29 = arith.addf %25, %19 : vector<16x128xf32>
    %30 = arith.addf %29, %28 : vector<16x128xf32>
    %31 = vector.broadcast %2 : vector<1x128xf32> to vector<16x128xf32>
    %32 = arith.addf %30, %31 : vector<16x128xf32>
    %cst_17 = arith.constant 0.000000e+00 : f32
    %33 = vector.broadcast %cst_17 : f32 to vector<16x128xf32>
    %34 = arith.maximumf %32, %33 : vector<16x128xf32>
    %cst_18 = arith.constant dense<0.000000e+00> : vector<128xf32>
    %35 = vector.multi_reduction <add>, %34, %cst_18 [0] : vector<16x128xf32> to vector<128xf32>
    %36 = vector.shape_cast %35 : vector<128xf32> to vector<1x128xf32>
    %37 = arith.mulf %34, %34 : vector<16x128xf32>
    %cst_19 = arith.constant dense<0.000000e+00> : vector<128xf32>
    %38 = vector.multi_reduction <add>, %37, %cst_19 [0] : vector<16x128xf32> to vector<128xf32>
    %39 = vector.shape_cast %38 : vector<128xf32> to vector<1x128xf32>
    %cst_20 = arith.constant dense<0.000000e+00> : vector<1x128xf32>
    %40 = tpu.matmul %36, %0, %cst_20 {dimension_numbers = #tpu.dot_dimension_numbers<[1], [0], [0], [1], [0, 0, 1, 1], [], []>} : vector<1x128xf32>, vector<128x128xf32>, vector<1x128xf32> -> vector<1x128xf32>
    %cst_21 = arith.constant dense<0.000000e+00> : vector<1x128xf32>
    %41 = tpu.matmul %39, %0, %cst_21 {dimension_numbers = #tpu.dot_dimension_numbers<[1], [0], [0], [1], [0, 0, 1, 1], [], []>} : vector<1x128xf32>, vector<128x128xf32>, vector<1x128xf32> -> vector<1x128xf32>
    %42 = arith.mulf %40, %40 : vector<1x128xf32>
    %43 = arith.subf %41, %42 : vector<1x128xf32>
    %cst_22 = arith.constant 9.99999974E-6 : f32
    %44 = vector.broadcast %cst_22 : f32 to vector<1x128xf32>
    %45 = arith.addf %43, %44 : vector<1x128xf32>
    %46 = math.rsqrt %45 : vector<1x128xf32>
    %47 = arith.mulf %4, %46 : vector<1x128xf32>
    %48 = vector.broadcast %40 : vector<1x128xf32> to vector<16x128xf32>
    %49 = arith.subf %34, %48 : vector<16x128xf32>
    %50 = vector.broadcast %47 : vector<1x128xf32> to vector<16x128xf32>
    %51 = arith.mulf %49, %50 : vector<16x128xf32>
    %52 = vector.broadcast %5 : vector<1x128xf32> to vector<16x128xf32>
    %53 = arith.addf %51, %52 : vector<16x128xf32>
    %c0_23 = arith.constant 0 : index
    %c0_24 = arith.constant 0 : index
    %c0_25 = arith.constant 0 : index
    %54 = vector.load %arg2[%c0_23, %c0_24, %c0_25] : memref<3x128x128xf32, #tpu.memory_space<vmem>>, vector<1x128x128xf32>
    %55 = vector.shape_cast %54 : vector<1x128x128xf32> to vector<128x128xf32>
    %cst_26 = arith.constant dense<0.000000e+00> : vector<16x128xf32>
    %56 = tpu.matmul %53, %55, %cst_26 {dimension_numbers = #tpu.dot_dimension_numbers<[1], [0], [0], [1], [0, 0, 1, 1], [], []>} : vector<16x128xf32>, vector<128x128xf32>, vector<16x128xf32> -> vector<16x128xf32>
    %c1_27 = arith.constant 1 : index
    %c0_28 = arith.constant 0 : index
    %c0_29 = arith.constant 0 : index
    %57 = vector.load %arg2[%c1_27, %c0_28, %c0_29] : memref<3x128x128xf32, #tpu.memory_space<vmem>>, vector<1x128x128xf32>
    %58 = vector.shape_cast %57 : vector<1x128x128xf32> to vector<128x128xf32>
    %cst_30 = arith.constant dense<0.000000e+00> : vector<16x128xf32>
    %59 = tpu.matmul %53, %58, %cst_30 {dimension_numbers = #tpu.dot_dimension_numbers<[1], [0], [0], [1], [0, 0, 1, 1], [], []>} : vector<16x128xf32>, vector<128x128xf32>, vector<16x128xf32> -> vector<16x128xf32>
    %c2_31 = arith.constant 2 : index
    %c0_32 = arith.constant 0 : index
    %c0_33 = arith.constant 0 : index
    %60 = vector.load %arg2[%c2_31, %c0_32, %c0_33] : memref<3x128x128xf32, #tpu.memory_space<vmem>>, vector<1x128x128xf32>
    %61 = vector.shape_cast %60 : vector<1x128x128xf32> to vector<128x128xf32>
    %cst_34 = arith.constant dense<0.000000e+00> : vector<16x128xf32>
    %62 = tpu.matmul %53, %61, %cst_34 {dimension_numbers = #tpu.dot_dimension_numbers<[1], [0], [0], [1], [0, 0, 1, 1], [], []>} : vector<16x128xf32>, vector<128x128xf32>, vector<16x128xf32> -> vector<16x128xf32>
    %c1_i32_35 = arith.constant 1 : i32
    %63 = tpu.dynamic_rotate %56 by %c1_i32_35 dim 0 : vector<16x128xf32>, i32 -> vector<16x128xf32>
    %cst_36 = arith.constant 0.000000e+00 : f32
    %64 = vector.broadcast %cst_36 : f32 to vector<16x128xf32>
    %65 = arith.select %10, %64, %63 : vector<16x128xi1>, vector<16x128xf32>
    %c15_i32_37 = arith.constant 15 : i32
    %66 = tpu.dynamic_rotate %62 by %c15_i32_37 dim 0 : vector<16x128xf32>, i32 -> vector<16x128xf32>
    %cst_38 = arith.constant 0.000000e+00 : f32
    %67 = vector.broadcast %cst_38 : f32 to vector<16x128xf32>
    %68 = arith.select %12, %67, %66 : vector<16x128xi1>, vector<16x128xf32>
    %69 = arith.addf %65, %59 : vector<16x128xf32>
    %70 = arith.addf %69, %68 : vector<16x128xf32>
    %71 = vector.broadcast %3 : vector<1x128xf32> to vector<16x128xf32>
    %72 = arith.addf %70, %71 : vector<16x128xf32>
    %73 = arith.addf %72, %13 : vector<16x128xf32>
    %cst_39 = arith.constant 0.000000e+00 : f32
    %74 = vector.broadcast %cst_39 : f32 to vector<16x128xf32>
    %75 = arith.maximumf %73, %74 : vector<16x128xf32>
    %cst_40 = arith.constant dense<0.000000e+00> : vector<128xf32>
    %76 = vector.multi_reduction <add>, %75, %cst_40 [0] : vector<16x128xf32> to vector<128xf32>
    %77 = vector.shape_cast %76 : vector<128xf32> to vector<1x128xf32>
    %78 = arith.mulf %75, %75 : vector<16x128xf32>
    %cst_41 = arith.constant dense<0.000000e+00> : vector<128xf32>
    %79 = vector.multi_reduction <add>, %78, %cst_41 [0] : vector<16x128xf32> to vector<128xf32>
    %80 = vector.shape_cast %79 : vector<128xf32> to vector<1x128xf32>
    %cst_42 = arith.constant dense<0.000000e+00> : vector<1x128xf32>
    %81 = tpu.matmul %77, %0, %cst_42 {dimension_numbers = #tpu.dot_dimension_numbers<[1], [0], [0], [1], [0, 0, 1, 1], [], []>} : vector<1x128xf32>, vector<128x128xf32>, vector<1x128xf32> -> vector<1x128xf32>
    %cst_43 = arith.constant dense<0.000000e+00> : vector<1x128xf32>
    %82 = tpu.matmul %80, %0, %cst_43 {dimension_numbers = #tpu.dot_dimension_numbers<[1], [0], [0], [1], [0, 0, 1, 1], [], []>} : vector<1x128xf32>, vector<128x128xf32>, vector<1x128xf32> -> vector<1x128xf32>
    %83 = arith.mulf %81, %81 : vector<1x128xf32>
    %84 = arith.subf %82, %83 : vector<1x128xf32>
    %cst_44 = arith.constant 9.99999974E-6 : f32
    %85 = vector.broadcast %cst_44 : f32 to vector<1x128xf32>
    %86 = arith.addf %84, %85 : vector<1x128xf32>
    %87 = math.rsqrt %86 : vector<1x128xf32>
    %88 = arith.mulf %6, %87 : vector<1x128xf32>
    %89 = vector.broadcast %81 : vector<1x128xf32> to vector<16x128xf32>
    %90 = arith.subf %75, %89 : vector<16x128xf32>
    %91 = vector.broadcast %88 : vector<1x128xf32> to vector<16x128xf32>
    %92 = arith.mulf %90, %91 : vector<16x128xf32>
    %93 = vector.broadcast %7 : vector<1x128xf32> to vector<16x128xf32>
    %94 = arith.addf %92, %93 : vector<16x128xf32>
    %c0_45 = arith.constant 0 : index
    %c0_46 = arith.constant 0 : index
    %95 = vector.load %arg5[%c0_45, %c0_46] : memref<16x128xf32, #tpu.memory_space<vmem>>, vector<16x128xf32>
    tpu.vector_store %arg5[%c0_45, %c0_46], %94 {strides = array<i32>} : memref<16x128xf32, #tpu.memory_space<vmem>>, vector<16x128xf32>,
    return
  }
}

</mosaic_0001>

<llo_original>
// kernel: tile.38
$region0: #{tile.38}
  #allocation0 [shape = 's32[1]{0}', space=sflag, size = 0x4, scoped, tag = 'scoped memory for tile.38']
  %s0 = inlined_call_operand.vmem [shape: f32[4], index: 0, kind: input, shape index: {}]
  %s1 = inlined_call_operand.vmem [shape: f32[32,4], index: 1, kind: output, shape index: {}]
  // Predicated region
  $region2: #{tile.38} parent=0 // pred_check
    _
  $region3: #{tile.38} parent=0 // pred_check_branch
    %3 = sbr.rel (0) target = $region5
  $region4: #{tile.38} parent=0 // pred_region
    _
  $region5: #{tile.38} parent=0 // pred_fallthru
    _
  %v4 = vld [vmem:[%s0] ss:$0 sm:$0xff]
  %5 = vst [vmem:[%s1] sm:$0xff] %v4
  %s6 = scalar_lea.vmem %s1, 8
  %7 = vst [vmem:[%s6] sm:$0xff] %v4
  %s8 = scalar_lea.vmem %s1, 16
  %9 = vst [vmem:[%s8] sm:$0xff] %v4
  %s10 = scalar_lea.vmem %s1, 24
  %11 = vst [vmem:[%s10] sm:$0xff] %v4

// kernel: tile.39
$region0: #{tile.39}
  %s0 = inlined_call_operand.vmem [shape: f32[32,4], index: 0, kind: input, shape index: {}]
  %s1 = inlined_call_operand.vmem [shape: f32[1,128], index: 1, kind: output, shape index: {}]
  $region1: #{tile.39} parent=0
    #allocation0 [shape = 'u8[4096]{0}', space=vmem, size = 0x1000, scoped, tag = 'scoped mem for output reshape']
    %v2 = vld [vmem:[%s0] sm:$0x1]
    %vm3 = vcmask 31744
    %4 = vst.msk [vmem:[#allocation0] sm:$0x1] %vm3, %v2
    %s5 = scalar_lea.vmem %s0, 31
    %v6 = vld [vmem:[%s5] sm:$0x1]
    %7 = vrot.lane.b32.xlu0 %v6, 124
    %v8 = vpop.permute.xlu0 %7
    %vm9 = vcmask 1048544
    %10 = vst.msk [vmem:[#allocation0] sm:$0x1] %vm9, %v8
    %s11 = scalar_lea.vmem %s0, 30
    %v12 = vld [vmem:[%s11] sm:$0x1]
    %13 = vrot.lane.b32.xlu0 %v12, 120
    %v14 = vpop.permute.xlu0 %13
    %vm15 = vcmask 1015744
    %16 = vst.msk [vmem:[#allocation0] sm:$0x1] %vm15, %v14
    %s17 = scalar_lea.vmem %s0, 29
    %v18 = vld [vmem:[%s17] sm:$0x1]
    %19 = vrot.lane.b32.xlu0 %v18, 116
    %v20 = vpop.permute.xlu0 %19
    %vm21 = vcmask 982944
    %22 = vst.msk [vmem:[#allocation0] sm:$0x1] %vm21, %v20
    %s23 = scalar_lea.vmem %s0, 28
    %v24 = vld [vmem:[%s23] sm:$0x1]
    %25 = vrot.lane.b32.xlu0 %v24, 112
    %v26 = vpop.permute.xlu0 %25
    %vm27 = vcmask 950144
    %28 = vst.msk [vmem:[#allocation0] sm:$0x1] %vm27, %v26
    %s29 = scalar_lea.vmem %s0, 27
    %v30 = vld [vmem:[%s29] sm:$0x1]
    %31 = vrot.lane.b32.xlu0 %v30, 108
    %v32 = vpop.permute.xlu0 %31
    %vm33 = vcmask 917344
    %34 = vst.msk [vmem:[#allocation0] sm:$0x1] %vm33, %v32
    %s35 = scalar_lea.vmem %s0, 26
    %v36 = vld [vmem:[%s35] sm:$0x1]
    %37 = vrot.lane.b32.xlu0 %v36, 104
    %v38 = vpop.permute.xlu0 %37
    %vm39 = vcmask 884544
    %40 = vst.msk [vmem:[#allocation0] sm:$0x1] %vm39, %v38
    %s41 = scalar_lea.vmem %s0, 25
    %v42 = vld [vmem:[%s41] sm:$0x1]
    %43 = vrot.lane.b32.xlu0 %v42, 100
    %v44 = vpop.permute.xlu0 %43
    %vm45 = vcmask 851744
    %46 = vst.msk [vmem:[#allocation0] sm:$0x1] %vm45, %v44
    %s47 = scalar_lea.vmem %s0, 24
    %v48 = vld [vmem:[%s47] sm:$0x1]
    %49 = vrot.lane.b32.xlu0 %v48, 96
    %v50 = vpop.permute.xlu0 %49
    %vm51 = vcmask 818944
    %52 = vst.msk [vmem:[#allocation0] sm:$0x1] %vm51, %v50
    %s53 = scalar_lea.vmem %s0, 23
    %v54 = vld [vmem:[%s53] sm:$0x1]
    %55 = vrot.lane.b32.xlu0 %v54, 92
    %v56 = vpop.permute.xlu0 %55
    %vm57 = vcmask 786144
    %58 = vst.msk [vmem:[#allocation0] sm:$0x1] %vm57, %v56
    %s59 = scalar_lea.vmem %s0, 22
    %v60 = vld [vmem:[%s59] sm:$0x1]
    %61 = vrot.lane.b32.xlu0 %v60, 88
    %v62 = vpop.permute.xlu0 %61
    %vm63 = vcmask 753344
    %64 = vst.msk [vmem:[#allocation0] sm:$0x1] %vm63, %v62
    %s65 = scalar_lea.vmem %s0, 21
    %v66 = vld [vmem:[%s65] sm:$0x1]
    %67 = vrot.lane.b32.xlu0 %v66, 84
    %v68 = vpop.permute.xlu0 %67
    %vm69 = vcmask 720544
    %70 = vst.msk [vmem:[#allocation0] sm:$0x1] %vm69, %v68
    %s71 = scalar_lea.vmem %s0, 20
    %v72 = vld [vmem:[%s71] sm:$0x1]
    %73 = vrot.lane.b32.xlu0 %v72, 80
    %v74 = vpop.permute.xlu0 %73
    %vm75 = vcmask 687744
    %76 = vst.msk [vmem:[#allocation0] sm:$0x1] %vm75, %v74
    %s77 = scalar_lea.vmem %s0, 19
    %v78 = vld [vmem:[%s77] sm:$0x1]
    %79 = vrot.lane.b32.xlu0 %v78, 76
    %v80 = vpop.permute.xlu0 %79
    %vm81 = vcmask 654944
    %82 = vst.msk [vmem:[#allocation0] sm:$0x1] %vm81, %v80
    %s83 = scalar_lea.vmem %s0, 18
    %v84 = vld [vmem:[%s83] sm:$0x1]
    %85 = vrot.lane.b32.xlu0 %v84, 72
    %v86 = vpop.permute.xlu0 %85
    %vm87 = vcmask 622144
    %88 = vst.msk [vmem:[#allocation0] sm:$0x1] %vm87, %v86
    %s89 = scalar_lea.vmem %s0, 17
    %v90 = vld [vmem:[%s89] sm:$0x1]
    %91 = vrot.lane.b32.xlu0 %v90, 68
    %v92 = vpop.permute.xlu0 %91
    %vm93 = vcmask 589344
    %94 = vst.msk [vmem:[#allocation0] sm:$0x1] %vm93, %v92
    %s95 = scalar_lea.vmem %s0, 16
    %v96 = vld [vmem:[%s95] sm:$0x1]
    %97 = vrot.lane.b32.xlu0 %v96, 64
    %v98 = vpop.permute.xlu0 %97
    %vm99 = vcmask 556544
    %100 = vst.msk [vmem:[#allocation0] sm:$0x1] %vm99, %v98
    %s101 = scalar_lea.vmem %s0, 15
    %v102 = vld [vmem:[%s101] sm:$0x1]
    %103 = vrot.lane.b32.xlu0 %v102, 60
    %v104 = vpop.permute.xlu0 %103
    %vm105 = vcmask 523744
    %106 = vst.msk [vmem:[#allocation0] sm:$0x1] %vm105, %v104
    %s107 = scalar_lea.vmem %s0, 14
    %v108 = vld [vmem:[%s107] sm:$0x1]
    %109 = vrot.lane.b32.xlu0 %v108, 56
    %v110 = vpop.permute.xlu0 %109
    %vm111 = vcmask 490944
    %112 = vst.msk [vmem:[#allocation0] sm:$0x1] %vm111, %v110
    %s113 = scalar_lea.vmem %s0, 13
    %v114 = vld [vmem:[%s113] sm:$0x1]
    %115 = vrot.lane.b32.xlu0 %v114, 52
    %v116 = vpop.permute.xlu0 %115
    %vm117 = vcmask 458144
    %118 = vst.msk [vmem:[#allocation0] sm:$0x1] %vm117, %v116
    %s119 = scalar_lea.vmem %s0, 12
    %v120 = vld [vmem:[%s119] sm:$0x1]
    %121 = vrot.lane.b32.xlu0 %v120, 48
    %v122 = vpop.permute.xlu0 %121
    %vm123 = vcmask 425344
    %124 = vst.msk [vmem:[#allocation0] sm:$0x1] %vm123, %v122
    %s125 = scalar_lea.vmem %s0, 11
    %v126 = vld [vmem:[%s125] sm:$0x1]
    %127 = vrot.lane.b32.xlu0 %v126, 44
    %v128 = vpop.permute.xlu0 %127
    %vm129 = vcmask 392544
    %130 = vst.msk [vmem:[#allocation0] sm:$0x1] %vm129, %v128
    %s131 = scalar_lea.vmem %s0, 10
    %v132 = vld [vmem:[%s131] sm:$0x1]
    %133 = vrot.lane.b32.xlu0 %v132, 40
    %v134 = vpop.permute.xlu0 %133
    %vm135 = vcmask 359744
    %136 = vst.msk [vmem:[#allocation0] sm:$0x1] %vm135, %v134
    %s137 = scalar_lea.vmem %s0, 9
    %v138 = vld [vmem:[%s137] sm:$0x1]
    %139 = vrot.lane.b32.xlu0 %v138, 36
    %v140 = vpop.permute.xlu0 %139
    %vm141 = vcmask 326944
    %142 = vst.msk [vmem:[#allocation0] sm:$0x1] %vm141, %v140
    %s143 = scalar_lea.vmem %s0, 8
    %v144 = vld [vmem:[%s143] sm:$0x1]
    %145 = vrot.lane.b32.xlu0 %v144, 32
    %v146 = vpop.permute.xlu0 %145
    %vm147 = vcmask 294144
    %148 = vst.msk [vmem:[#allocation0] sm:$0x1] %vm147, %v146
    %s149 = scalar_lea.vmem %s0, 7
    %v150 = vld [vmem:[%s149] sm:$0x1]
    %151 = vrot.lane.b32.xlu0 %v150, 28
    %v152 = vpop.permute.xlu0 %151
    %vm153 = vcmask 261344
    %154 = vst.msk [vmem:[#allocation0] sm:$0x1] %vm153, %v152
    %s155 = scalar_lea.vmem %s0, 6
    %v156 = vld [vmem:[%s155] sm:$0x1]
    %157 = vrot.lane.b32.xlu0 %v156, 24
    %v158 = vpop.permute.xlu0 %157
    %vm159 = vcmask 228544
    %160 = vst.msk [vmem:[#allocation0] sm:$0x1] %vm159, %v158
    %s161 = scalar_lea.vmem %s0, 5
    %v162 = vld [vmem:[%s161] sm:$0x1]
    %163 = vrot.lane.b32.xlu0 %v162, 20
    %v164 = vpop.permute.xlu0 %163
    %vm165 = vcmask 195744
    %166 = vst.msk [vmem:[#allocation0] sm:$0x1] %vm165, %v164
    %s167 = scalar_lea.vmem %s0, 4
    %v168 = vld [vmem:[%s167] sm:$0x1]
    %169 = vrot.lane.b32.xlu0 %v168, 16
    %v170 = vpop.permute.xlu0 %169
    %vm171 = vcmask 162944
    %172 = vst.msk [vmem:[#allocation0] sm:$0x1] %vm171, %v170
    %s173 = scalar_lea.vmem %s0, 3
    %v174 = vld [vmem:[%s173] sm:$0x1]
    %175 = vrot.lane.b32.xlu0 %v174, 12
    %v176 = vpop.permute.xlu0 %175
    %vm177 = vcmask 130144
    %178 = vst.msk [vmem:[#allocation0] sm:$0x1] %vm177, %v176
    %s179 = scalar_lea.vmem %s0, 2
    %v180 = vld [vmem:[%s179] sm:$0x1]
    %181 = vrot.lane.b32.xlu0 %v180, 8
    %v182 = vpop.permute.xlu0 %181
    %vm183 = vcmask 97344
    %184 = vst.msk [vmem:[#allocation0] sm:$0x1] %vm183, %v182
    %s185 = scalar_lea.vmem %s0, 1
    %v186 = vld [vmem:[%s185] sm:$0x1]
    %187 = vrot.lane.b32.xlu0 %v186, 4
    %v188 = vpop.permute.xlu0 %187
    %vm189 = vcmask 64544
    %190 = vst.msk [vmem:[#allocation0] sm:$0x1] %vm189, %v188
    %s192 = sshllo.u32 0, 1
    %v194 = vld [vmem:[#allocation0] sm:%s192]
    %s195 = sshllo.u32 0, 1
    %196 = vst [vmem:[%s1] sm:%s195] %v194

// kernel: resblock_forward.1
$region0: #{resblock_forward.1}
  #allocation0 [shape = 'u32[]', space=smem, size = 0x4, offset = 0x4, fixed_abs, tag = 'smem constant byte address 0x4 - core index']
  #allocation1 [shape = 'u32[144,128]{1,0:T(1,128)}', space=vmem, size = 0x12000, scoped, tag = 'internal scratch']
  %s0 = inlined_call_operand.vmem [shape: f32[16,128], index: 0, kind: input, shape index: {}]
  %s1 = inlined_call_operand.vmem [shape: f32[3,128,128], index: 1, kind: input, shape index: {}]
  %s2 = inlined_call_operand.vmem [shape: f32[3,128,128], index: 2, kind: input, shape index: {}]
  %s3 = inlined_call_operand.vmem [shape: f32[128,128], index: 3, kind: input, shape index: {}]
  %s4 = inlined_call_operand.vmem [shape: f32[6,128], index: 4, kind: input, shape index: {}]
  %s5 = inlined_call_operand.vmem [shape: f32[16,128], index: 5, kind: output, shape index: {}]
  %s6 = sld [smem:[#allocation0]]
  $region30: #{resblock_forward.1} parent=0
    _
  %s8 = ssub.s32 1, %s6
  %s9 = scalar_select 0, %s8, %s6
  // Predicated region
  $region2: #{resblock_forward.1} parent=0 // pred_check
    _
  $region3: #{resblock_forward.1} parent=0 // pred_check_branch
    %11 = sbr.rel (0) target = $region5
  $region4: #{resblock_forward.1} parent=0 // pred_region
    _
  $region5: #{resblock_forward.1} parent=0 // pred_fallthru
    _
  // Predicated region
  $region6: #{resblock_forward.1} parent=0 // pred_check
    _
  $region7: #{resblock_forward.1} parent=0 // pred_check_branch
    %13 = sbr.rel (0) target = $region9
  $region8: #{resblock_forward.1} parent=0 // pred_region
    _
  $region9: #{resblock_forward.1} parent=0 // pred_fallthru
    _
  // Predicated region
  $region10: #{resblock_forward.1} parent=0 // pred_check
    _
  $region11: #{resblock_forward.1} parent=0 // pred_check_branch
    %15 = sbr.rel (0) target = $region13
  $region12: #{resblock_forward.1} parent=0 // pred_region
    _
  $region13: #{resblock_forward.1} parent=0 // pred_fallthru
    _
  // Predicated region
  $region14: #{resblock_forward.1} parent=0 // pred_check
    _
  $region15: #{resblock_forward.1} parent=0 // pred_check_branch
    %17 = sbr.rel (0) target = $region17
  $region16: #{resblock_forward.1} parent=0 // pred_region
    _
  $region17: #{resblock_forward.1} parent=0 // pred_fallthru
    _
  // Predicated region
  $region18: #{resblock_forward.1} parent=0 // pred_check
    _
  $region19: #{resblock_forward.1} parent=0 // pred_check_branch
    %19 = sbr.rel (0) target = $region21
  $region20: #{resblock_forward.1} parent=0 // pred_region
    _
  $region21: #{resblock_forward.1} parent=0 // pred_fallthru
    _
  %v20 = vld [vmem:[%s3] sm:$0xff]
  %v21 = vld [vmem:[%s3 + $0x8] sm:$0xff]
  %v22 = vld [vmem:[%s3 + $0x10] sm:$0xff]
  %v23 = vld [vmem:[%s3 + $0x18] sm:$0xff]
  %v24 = vld [vmem:[%s3 + $0x20] sm:$0xff]
  %v25 = vld [vmem:[%s3 + $0x28] sm:$0xff]
  %v26 = vld [vmem:[%s3 + $0x30] sm:$0xff]
  %v27 = vld [vmem:[%s3 + $0x38] sm:$0xff]
  %v28 = vld [vmem:[%s3 + $0x40] sm:$0xff]
  %v29 = vld [vmem:[%s3 + $0x48] sm:$0xff]
  %v30 = vld [vmem:[%s3 + $0x50] sm:$0xff]
  %v31 = vld [vmem:[%s3 + $0x58] sm:$0xff]
  %v32 = vld [vmem:[%s3 + $0x60] sm:$0xff]
  %v33 = vld [vmem:[%s3 + $0x68] sm:$0xff]
  %v34 = vld [vmem:[%s3 + $0x70] sm:$0xff]
  %v35 = vld [vmem:[%s3 + $0x78] sm:$0xff]
  %v36 = vld [vmem:[%s4] sm:$0x3f]
  %v37 = vlaneseq
  %v38 = vshrl.u32 %v37, 7
  %v39 = vadd.s32 %v38, 8
  %vm40 = vcmp.eq.s32.totalorder %v38, 0
  %vm41 = vcmp.eq.s32.totalorder %v39, 0
  %vm42 = vcmp.eq.s32.totalorder %v38, 15
  %vm43 = vcmp.eq.s32.totalorder %v39, 15
  %v44 = vld [vmem:[%s0] sm:$0xff]
  %v45 = vld [vmem:[%s0 + $0x8] sm:$0xff]
  %v46 = vld [vmem:[%s1] sm:$0xff]
  %v47 = vld [vmem:[%s1 + $0x8] sm:$0xff]
  %v48 = vld [vmem:[%s1 + $0x10] sm:$0xff]
  %v49 = vld [vmem:[%s1 + $0x18] sm:$0xff]
  %v50 = vld [vmem:[%s1 + $0x20] sm:$0xff]
  %v51 = vld [vmem:[%s1 + $0x28] sm:$0xff]
  %v52 = vld [vmem:[%s1 + $0x30] sm:$0xff]
  %v53 = vld [vmem:[%s1 + $0x38] sm:$0xff]
  %v54 = vld [vmem:[%s1 + $0x40] sm:$0xff]
  %v55 = vld [vmem:[%s1 + $0x48] sm:$0xff]
  %v56 = vld [vmem:[%s1 + $0x50] sm:$0xff]
  %v57 = vld [vmem:[%s1 + $0x58] sm:$0xff]
  %v58 = vld [vmem:[%s1 + $0x60] sm:$0xff]
  %v59 = vld [vmem:[%s1 + $0x68] sm:$0xff]
  %v60 = vld [vmem:[%s1 + $0x70] sm:$0xff]
  %v61 = vld [vmem:[%s1 + $0x78] sm:$0xff]
  %62 = vmatprep.subr.mxu0 0.0
  %63 = vmatpush1.msra.mxu0 %v46
  %64 = vmatprep.subr.mxu0 0.0
  %65 = vmatpush1.msra.mxu0 %v47
  %66 = vmatprep.subr.mxu0 0.0
  %67 = vmatpush1.msra.mxu0 %v48
  %68 = vmatprep.subr.mxu0 0.0
  %69 = vmatpush1.msra.mxu0 %v49
  %70 = vmatprep.subr.mxu0 0.0
  %71 = vmatpush1.msra.mxu0 %v50
  %72 = vmatprep.subr.mxu0 0.0
  %73 = vmatpush1.msra.mxu0 %v51
  %74 = vmatprep.subr.mxu0 0.0
  %75 = vmatpush1.msra.mxu0 %v52
  %76 = vmatprep.subr.mxu0 0.0
  %77 = vmatpush1.msra.mxu0 %v53
  %78 = vmatprep.subr.mxu0 0.0
  %79 = vmatpush1.msra.mxu0 %v54
  %80 = vmatprep.subr.mxu0 0.0
  %81 = vmatpush1.msra.mxu0 %v55
  %82 = vmatprep.subr.mxu0 0.0
  %83 = vmatpush1.msra.mxu0 %v56
  %84 = vmatprep.subr.mxu0 0.0
  %85 = vmatpush1.msra.mxu0 %v57
  %86 = vmatprep.subr.mxu0 0.0
  %87 = vmatpush1.msra.mxu0 %v58
  %88 = vmatprep.subr.mxu0 0.0
  %89 = vmatpush1.msra.mxu0 %v59
  %90 = vmatprep.subr.mxu0 0.0
  %91 = vmatpush1.msra.mxu0 %v60
  %92 = vmatprep.subr.mxu0 0.0
  %93 = vmatpush1.msra.mxu0 %v61
  %94 = vmatprep.subr.mxu0 0.0
  %95 = vmatpush1.msra.mxu0 0.0
  %96 = vmatprep.subr.mxu0 0.0
  %97 = vmatpush1.msra.mxu0 0.0
  %98 = vmatprep.subr.mxu0 0.0
  %99 = vmatpush1.msra.mxu0 0.0
  %100 = vmatprep.subr.mxu0 0.0
  %101 = vmatpush1.msra.mxu0 0.0
  %102 = vmatprep.subr.mxu0 0.0
  %103 = vmatpush1.msra.mxu0 0.0
  %104 = vmatprep.subr.mxu0 0.0
  %105 = vmatpush1.msra.mxu0 0.0
  %106 = vmatprep.subr.mxu0 0.0
  %107 = vmatpush1.msra.mxu0 0.0
  %108 = vmatprep.subr.mxu0 0.0
  %109 = vmatpush1.msra.mxu0 0.0
  %110 = vmatprep.subr.mxu0 0.0
  %111 = vmatpush1.msra.mxu0 0.0
  %112 = vmatprep.subr.mxu0 0.0
  %113 = vmatpush1.msra.mxu0 0.0
  %114 = vmatprep.subr.mxu0 0.0
  %115 = vmatpush1.msra.mxu0 0.0
  %116 = vmatprep.subr.mxu0 0.0
  %117 = vmatpush1.msra.mxu0 0.0
  %118 = vmatprep.subr.mxu0 0.0
  %119 = vmatpush1.msra.mxu0 0.0
  %120 = vmatprep.subr.mxu0 0.0
  %121 = vmatpush1.msra.mxu0 0.0
  %122 = vmatprep.subr.mxu0 0.0
  %123 = vmatpush1.msra.mxu0 0.0
  %124 = vmatprep.subr.mxu0 0.0
  %125 = vmatpush1.msra.mxu0 0.0
  %126 = vmatprep.mubr.f32.mxu0 0.0
  %127 = vmatmul.mubr.f32.gmra.mrb[0].mxu0 %v44
  %v128 = vpop.f32.mrb[0].mxu0
  %v129 = vadd.f32 0.0, %v128
  %v130 = vpop.f32.mrb[0].mxu0
  %131 = vmatprep.mubr.f32.mxu0 0.0
  %132 = vmatmul.mubr.f32.gmra.mrb[0].mxu0 %v45
  %v133 = vpop.f32.mrb[0].mxu0
  %v134 = vadd.f32 0.0, %v133
  %v135 = vpop.f32.mrb[0].mxu0
  %136 = vdwg.mxu0
  %s137 = scalar_lea.vmem %s1, 128
  %v138 = vld [vmem:[%s137] sm:$0xff]
  %v139 = vld [vmem:[%s137 + $0x8] sm:$0xff]
  %v140 = vld [vmem:[%s137 + $0x10] sm:$0xff]
  %v141 = vld [vmem:[%s137 + $0x18] sm:$0xff]
  %v142 = vld [vmem:[%s137 + $0x20] sm:$0xff]
  %v143 = vld [vmem:[%s137 + $0x28] sm:$0xff]
  %v144 = vld [vmem:[%s137 + $0x30] sm:$0xff]
  %v145 = vld [vmem:[%s137 + $0x38] sm:$0xff]
  %v146 = vld [vmem:[%s137 + $0x40] sm:$0xff]
  %v147 = vld [vmem:[%s137 + $0x48] sm:$0xff]
  %v148 = vld [vmem:[%s137 + $0x50] sm:$0xff]
  %v149 = vld [vmem:[%s137 + $0x58] sm:$0xff]
  %v150 = vld [vmem:[%s137 + $0x60] sm:$0xff]
  %v151 = vld [vmem:[%s137 + $0x68] sm:$0xff]
  %v152 = vld [vmem:[%s137 + $0x70] sm:$0xff]
  %v153 = vld [vmem:[%s137 + $0x78] sm:$0xff]
  %154 = vmatprep.subr.mxu0 0.0
  %155 = vmatpush1.msra.mxu0 %v138
  %156 = vmatprep.subr.mxu0 0.0
  %157 = vmatpush1.msra.mxu0 %v139
  %158 = vmatprep.subr.mxu0 0.0
  %159 = vmatpush1.msra.mxu0 %v140
  %160 = vmatprep.subr.mxu0 0.0
  %161 = vmatpush1.msra.mxu0 %v141
  %162 = vmatprep.subr.mxu0 0.0
  %163 = vmatpush1.msra.mxu0 %v142
  %164 = vmatprep.subr.mxu0 0.0
  %165 = vmatpush1.msra.mxu0 %v143
  %166 = vmatprep.subr.mxu0 0.0
  %167 = vmatpush1.msra.mxu0 %v144
  %168 = vmatprep.subr.mxu0 0.0
  %169 = vmatpush1.msra.mxu0 %v145
  %170 = vmatprep.subr.mxu0 0.0
  %171 = vmatpush1.msra.mxu0 %v146
  %172 = vmatprep.subr.mxu0 0.0
  %173 = vmatpush1.msra.mxu0 %v147
  %174 = vmatprep.subr.mxu0 0.0
  %175 = vmatpush1.msra.mxu0 %v148
  %176 = vmatprep.subr.mxu0 0.0
  %177 = vmatpush1.msra.mxu0 %v149
  %178 = vmatprep.subr.mxu0 0.0
  %179 = vmatpush1.msra.mxu0 %v150
  %180 = vmatprep.subr.mxu0 0.0
  %181 = vmatpush1.msra.mxu0 %v151
  %182 = vmatprep.subr.mxu0 0.0
  %183 = vmatpush1.msra.mxu0 %v152
  %184 = vmatprep.subr.mxu0 0.0
  %185 = vmatpush1.msra.mxu0 %v153
  %186 = vmatprep.subr.mxu0 0.0
  %187 = vmatpush1.msra.mxu0 0.0
  %188 = vmatprep.subr.mxu0 0.0
  %189 = vmatpush1.msra.mxu0 0.0
  %190 = vmatprep.subr.mxu0 0.0
  %191 = vmatpush1.msra.mxu0 0.0
  %192 = vmatprep.subr.mxu0 0.0
  %193 = vmatpush1.msra.mxu0 0.0
  %194 = vmatprep.subr.mxu0 0.0
  %195 = vmatpush1.msra.mxu0 0.0
  %196 = vmatprep.subr.mxu0 0.0
  %197 = vmatpush1.msra.mxu0 0.0
  %198 = vmatprep.subr.mxu0 0.0
  %199 = vmatpush1.msra.mxu0 0.0
  %200 = vmatprep.subr.mxu0 0.0
  %201 = vmatpush1.msra.mxu0 0.0
  %202 = vmatprep.subr.mxu0 0.0
  %203 = vmatpush1.msra.mxu0 0.0
  %204 = vmatprep.subr.mxu0 0.0
  %205 = vmatpush1.msra.mxu0 0.0
  %206 = vmatprep.subr.mxu0 0.0
  %207 = vmatpush1.msra.mxu0 0.0
  %208 = vmatprep.subr.mxu0 0.0
  %209 = vmatpush1.msra.mxu0 0.0
  %210 = vmatprep.subr.mxu0 0.0
  %211 = vmatpush1.msra.mxu0 0.0
  %212 = vmatprep.subr.mxu0 0.0
  %213 = vmatpush1.msra.mxu0 0.0
  %214 = vmatprep.subr.mxu0 0.0
  %215 = vmatpush1.msra.mxu0 0.0
  %216 = vmatprep.subr.mxu0 0.0
  %217 = vmatpush1.msra.mxu0 0.0
  %218 = vmatprep.mubr.f32.mxu0 0.0
  %219 = vmatmul.mubr.f32.gmra.mrb[0].mxu0 %v44
  %v220 = vpop.f32.mrb[0].mxu0
  %v221 = vadd.f32 0.0, %v220
  %v222 = vpop.f32.mrb[0].mxu0
  %223 = vmatprep.mubr.f32.mxu0 0.0
  %224 = vmatmul.mubr.f32.gmra.mrb[0].mxu0 %v45
  %v225 = vpop.f32.mrb[0].mxu0
  %v226 = vadd.f32 0.0, %v225
  %v227 = vpop.f32.mrb[0].mxu0
  %228 = vdwg.mxu0
  %s229 = scalar_lea.vmem %s1, 256
  %v230 = vld [vmem:[%s229] sm:$0xff]
  %v231 = vld [vmem:[%s229 + $0x8] sm:$0xff]
  %v232 = vld [vmem:[%s229 + $0x10] sm:$0xff]
  %v233 = vld [vmem:[%s229 + $0x18] sm:$0xff]
  %v234 = vld [vmem:[%s229 + $0x20] sm:$0xff]
  %v235 = vld [vmem:[%s229 + $0x28] sm:$0xff]
  %v236 = vld [vmem:[%s229 + $0x30] sm:$0xff]
  %v237 = vld [vmem:[%s229 + $0x38] sm:$0xff]
  %v238 = vld [vmem:[%s229 + $0x40] sm:$0xff]
  %v239 = vld [vmem:[%s229 + $0x48] sm:$0xff]
  %v240 = vld [vmem:[%s229 + $0x50] sm:$0xff]
  %v241 = vld [vmem:[%s229 + $0x58] sm:$0xff]
  %v242 = vld [vmem:[%s229 + $0x60] sm:$0xff]
  %v243 = vld [vmem:[%s229 + $0x68] sm:$0xff]
  %v244 = vld [vmem:[%s229 + $0x70] sm:$0xff]
  %v245 = vld [vmem:[%s229 + $0x78] sm:$0xff]
  %246 = vmatprep.subr.mxu0 0.0
  %247 = vmatpush1.msra.mxu0 %v230
  %248 = vmatprep.subr.mxu0 0.0
  %249 = vmatpush1.msra.mxu0 %v231
  %250 = vmatprep.subr.mxu0 0.0
  %251 = vmatpush1.msra.mxu0 %v232
  %252 = vmatprep.subr.mxu0 0.0
  %253 = vmatpush1.msra.mxu0 %v233
  %254 = vmatprep.subr.mxu0 0.0
  %255 = vmatpush1.msra.mxu0 %v234
  %256 = vmatprep.subr.mxu0 0.0
  %257 = vmatpush1.msra.mxu0 %v235
  %258 = vmatprep.subr.mxu0 0.0
  %259 = vmatpush1.msra.mxu0 %v236
  %260 = vmatprep.subr.mxu0 0.0
  %261 = vmatpush1.msra.mxu0 %v237
  %262 = vmatprep.subr.mxu0 0.0
  %263 = vmatpush1.msra.mxu0 %v238
  %264 = vmatprep.subr.mxu0 0.0
  %265 = vmatpush1.msra.mxu0 %v239
  %266 = vmatprep.subr.mxu0 0.0
  %267 = vmatpush1.msra.mxu0 %v240
  %268 = vmatprep.subr.mxu0 0.0
  %269 = vmatpush1.msra.mxu0 %v241
  %270 = vmatprep.subr.mxu0 0.0
  %271 = vmatpush1.msra.mxu0 %v242
  %272 = vmatprep.subr.mxu0 0.0
  %273 = vmatpush1.msra.mxu0 %v243
  %274 = vmatprep.subr.mxu0 0.0
  %275 = vmatpush1.msra.mxu0 %v244
  %276 = vmatprep.subr.mxu0 0.0
  %277 = vmatpush1.msra.mxu0 %v245
  %278 = vmatprep.subr.mxu0 0.0
  %279 = vmatpush1.msra.mxu0 0.0
  %280 = vmatprep.subr.mxu0 0.0
  %281 = vmatpush1.msra.mxu0 0.0
  %282 = vmatprep.subr.mxu0 0.0
  %283 = vmatpush1.msra.mxu0 0.0
  %284 = vmatprep.subr.mxu0 0.0
  %285 = vmatpush1.msra.mxu0 0.0
  %286 = vmatprep.subr.mxu0 0.0
  %287 = vmatpush1.msra.mxu0 0.0
  %288 = vmatprep.subr.mxu0 0.0
  %289 = vmatpush1.msra.mxu0 0.0
  %290 = vmatprep.subr.mxu0 0.0
  %291 = vmatpush1.msra.mxu0 0.0
  %292 = vmatprep.subr.mxu0 0.0
  %293 = vmatpush1.msra.mxu0 0.0
  %294 = vmatprep.subr.mxu0 0.0
  %295 = vmatpush1.msra.mxu0 0.0
  %296 = vmatprep.subr.mxu0 0.0
  %297 = vmatpush1.msra.mxu0 0.0
  %298 = vmatprep.subr.mxu0 0.0
  %299 = vmatpush1.msra.mxu0 0.0
  %300 = vmatprep.subr.mxu0 0.0
  %301 = vmatpush1.msra.mxu0 0.0
  %302 = vmatprep.subr.mxu0 0.0
  %303 = vmatpush1.msra.mxu0 0.0
  %304 = vmatprep.subr.mxu0 0.0
  %305 = vmatpush1.msra.mxu0 0.0
  %306 = vmatprep.subr.mxu0 0.0
  %307 = vmatpush1.msra.mxu0 0.0
  %308 = vmatprep.subr.mxu0 0.0
  %309 = vmatpush1.msra.mxu0 0.0
  %310 = vmatprep.mubr.f32.mxu0 0.0
  %311 = vmatmul.mubr.f32.gmra.mrb[0].mxu0 %v44
  %v312 = vpop.f32.mrb[0].mxu0
  %v313 = vadd.f32 0.0, %v312
  %v314 = vpop.f32.mrb[0].mxu0
  %315 = vmatprep.mubr.f32.mxu0 0.0
  %316 = vmatmul.mubr.f32.gmra.mrb[0].mxu0 %v45
  %v317 = vpop.f32.mrb[0].mxu0
  %v318 = vadd.f32 0.0, %v317
  %v319 = vpop.f32.mrb[0].mxu0
  %320 = vdwg.mxu0
  %v321 = vrot.slane %v129, 7
  %v322 = vrot.slane %v134, 7
  %vm323 = vcmp.lt.s32.totalorder %v38, 1
  %v324 = vsel %vm323, %v321, %v322
  %v325 = vsel %vm323, %v322, %v321
  %v326 = vsel %vm40, 0.0, %v325
  %v327 = vsel %vm41, 0.0, %v324
  %v328 = vrot.slane %v313, 1
  %v329 = vrot.slane %v318, 1
  %vm330 = vcmp.lt.s32.totalorder %v38, 7
  %v331 = vsel %vm330, %v328, %v329
  %v332 = vsel %vm330, %v329, %v328
  %v333 = vsel %vm42, 0.0, %v331
  %v334 = vsel %vm43, 0.0, %v332
  %v335 = vadd.f32 %v326, %v221
  %v336 = vadd.f32 %v327, %v226
  %v337 = vadd.f32 %v335, %v333
  %v338 = vadd.f32 %v336, %v334
  %v339 = vlaneseq
  %v340 = vshrl.u32 %v339, 7
  %v341 = vsub.s32 0, %v340
  %v342 = vrot.slane %v36, %v341
  %v343 = vadd.f32 %v337, %v342
  %v344 = vadd.f32 %v338, %v342
  %v345 = vmax.f32 %v343, 0.0
  %v346 = vmax.f32 %v344, 0.0
  %v347 = vadd.f32 %v345, %v346
  %v348 = vrot.slane %v347, 4
  %v349 = vadd.f32 %v347, %v348
  %v350 = vrot.slane %v349, 2
  %v351 = vadd.f32 %v349, %v350
  %v352 = vrot.slane %v351, 1
  %v353 = vadd.f32 %v351, %v352
  %v354 = vmul.f32 %v345, %v345
  %v355 = vmul.f32 %v346, %v346
  %v356 = vadd.f32 %v354, %v355
  %v357 = vrot.slane %v356, 4
  %v358 = vadd.f32 %v356, %v357
  %v359 = vrot.slane %v358, 2
  %v360 = vadd.f32 %v358, %v359
  %v361 = vrot.slane %v360, 1
  %v362 = vadd.f32 %v360, %v361
  %363 = vmatprep.subr.mxu0 0.0
  %364 = vmatpush1.msra.mxu0 %v20
  %365 = vmatprep.subr.mxu0 0.0
  %366 = vmatpush1.msra.mxu0 %v21
  %367 = vmatprep.subr.mxu0 0.0
  %368 = vmatpush1.msra.mxu0 %v22
  %369 = vmatprep.subr.mxu0 0.0
  %370 = vmatpush1.msra.mxu0 %v23
  %371 = vmatprep.subr.mxu0 0.0
  %372 = vmatpush1.msra.mxu0 %v24
  %373 = vmatprep.subr.mxu0 0.0
  %374 = vmatpush1.msra.mxu0 %v25
  %375 = vmatprep.subr.mxu0 0.0
  %376 = vmatpush1.msra.mxu0 %v26
  %377 = vmatprep.subr.mxu0 0.0
  %378 = vmatpush1.msra.mxu0 %v27
  %379 = vmatprep.subr.mxu0 0.0
  %380 = vmatpush1.msra.mxu0 %v28
  %381 = vmatprep.subr.mxu0 0.0
  %382 = vmatpush1.msra.mxu0 %v29
  %383 = vmatprep.subr.mxu0 0.0
  %384 = vmatpush1.msra.mxu0 %v30
  %385 = vmatprep.subr.mxu0 0.0
  %386 = vmatpush1.msra.mxu0 %v31
  %387 = vmatprep.subr.mxu0 0.0
  %388 = vmatpush1.msra.mxu0 %v32
  %389 = vmatprep.subr.mxu0 0.0
  %390 = vmatpush1.msra.mxu0 %v33
  %391 = vmatprep.subr.mxu0 0.0
  %392 = vmatpush1.msra.mxu0 %v34
  %393 = vmatprep.subr.mxu0 0.0
  %394 = vmatpush1.msra.mxu0 %v35
  %395 = vmatprep.subr.mxu0 0.0
  %396 = vmatpush1.msra.mxu0 0.0
  %397 = vmatprep.subr.mxu0 0.0
  %398 = vmatpush1.msra.mxu0 0.0
  %399 = vmatprep.subr.mxu0 0.0
  %400 = vmatpush1.msra.mxu0 0.0
  %401 = vmatprep.subr.mxu0 0.0
  %402 = vmatpush1.msra.mxu0 0.0
  %403 = vmatprep.subr.mxu0 0.0
  %404 = vmatpush1.msra.mxu0 0.0
  %405 = vmatprep.subr.mxu0 0.0
  %406 = vmatpush1.msra.mxu0 0.0
  %407 = vmatprep.subr.mxu0 0.0
  %408 = vmatpush1.msra.mxu0 0.0
  %409 = vmatprep.subr.mxu0 0.0
  %410 = vmatpush1.msra.mxu0 0.0
  %411 = vmatprep.subr.mxu0 0.0
  %412 = vmatpush1.msra.mxu0 0.0
  %413 = vmatprep.subr.mxu0 0.0
  %414 = vmatpush1.msra.mxu0 0.0
  %415 = vmatprep.subr.mxu0 0.0
  %416 = vmatpush1.msra.mxu0 0.0
  %417 = vmatprep.subr.mxu0 0.0
  %418 = vmatpush1.msra.mxu0 0.0
  %419 = vmatprep.subr.mxu0 0.0
  %420 = vmatpush1.msra.mxu0 0.0
  %421 = vmatprep.subr.mxu0 0.0
  %422 = vmatpush1.msra.mxu0 0.0
  %423 = vmatprep.subr.mxu0 0.0
  %424 = vmatpush1.msra.mxu0 0.0
  %425 = vmatprep.subr.mxu0 0.0
  %426 = vmatpush1.msra.mxu0 0.0
  %427 = vmatprep.mubr.f32.mxu0 0.0
  %428 = vmatmul.mubr.f32.gmra.mrb[0].mxu0 %v353
  %v429 = vpop.f32.mrb[0].mxu0
  %v430 = vadd.f32 0.0, %v429
  %v431 = vpop.f32.mrb[0].mxu0
  %432 = vdwg.mxu0
  %433 = vmatprep.subr.mxu0 0.0
  %434 = vmatpush1.msra.mxu0 %v20
  %435 = vmatprep.subr.mxu0 0.0
  %436 = vmatpush1.msra.mxu0 %v21
  %437 = vmatprep.subr.mxu0 0.0
  %438 = vmatpush1.msra.mxu0 %v22
  %439 = vmatprep.subr.mxu0 0.0
  %440 = vmatpush1.msra.mxu0 %v23
  %441 = vmatprep.subr.mxu0 0.0
  %442 = vmatpush1.msra.mxu0 %v24
  %443 = vmatprep.subr.mxu0 0.0
  %444 = vmatpush1.msra.mxu0 %v25
  %445 = vmatprep.subr.mxu0 0.0
  %446 = vmatpush1.msra.mxu0 %v26
  %447 = vmatprep.subr.mxu0 0.0
  %448 = vmatpush1.msra.mxu0 %v27
  %449 = vmatprep.subr.mxu0 0.0
  %450 = vmatpush1.msra.mxu0 %v28
  %451 = vmatprep.subr.mxu0 0.0
  %452 = vmatpush1.msra.mxu0 %v29
  %453 = vmatprep.subr.mxu0 0.0
  %454 = vmatpush1.msra.mxu0 %v30
  %455 = vmatprep.subr.mxu0 0.0
  %456 = vmatpush1.msra.mxu0 %v31
  %457 = vmatprep.subr.mxu0 0.0
  %458 = vmatpush1.msra.mxu0 %v32
  %459 = vmatprep.subr.mxu0 0.0
  %460 = vmatpush1.msra.mxu0 %v33
  %461 = vmatprep.subr.mxu0 0.0
  %462 = vmatpush1.msra.mxu0 %v34
  %463 = vmatprep.subr.mxu0 0.0
  %464 = vmatpush1.msra.mxu0 %v35
  %465 = vmatprep.subr.mxu0 0.0
  %466 = vmatpush1.msra.mxu0 0.0
  %467 = vmatprep.subr.mxu0 0.0
  %468 = vmatpush1.msra.mxu0 0.0
  %469 = vmatprep.subr.mxu0 0.0
  %470 = vmatpush1.msra.mxu0 0.0
  %471 = vmatprep.subr.mxu0 0.0
  %472 = vmatpush1.msra.mxu0 0.0
  %473 = vmatprep.subr.mxu0 0.0
  %474 = vmatpush1.msra.mxu0 0.0
  %475 = vmatprep.subr.mxu0 0.0
  %476 = vmatpush1.msra.mxu0 0.0
  %477 = vmatprep.subr.mxu0 0.0
  %478 = vmatpush1.msra.mxu0 0.0
  %479 = vmatprep.subr.mxu0 0.0
  %480 = vmatpush1.msra.mxu0 0.0
  %481 = vmatprep.subr.mxu0 0.0
  %482 = vmatpush1.msra.mxu0 0.0
  %483 = vmatprep.subr.mxu0 0.0
  %484 = vmatpush1.msra.mxu0 0.0
  %485 = vmatprep.subr.mxu0 0.0
  %486 = vmatpush1.msra.mxu0 0.0
  %487 = vmatprep.subr.mxu0 0.0
  %488 = vmatpush1.msra.mxu0 0.0
  %489 = vmatprep.subr.mxu0 0.0
  %490 = vmatpush1.msra.mxu0 0.0
  %491 = vmatprep.subr.mxu0 0.0
  %492 = vmatpush1.msra.mxu0 0.0
  %493 = vmatprep.subr.mxu0 0.0
  %494 = vmatpush1.msra.mxu0 0.0
  %495 = vmatprep.subr.mxu0 0.0
  %496 = vmatpush1.msra.mxu0 0.0
  %497 = vmatprep.mubr.f32.mxu0 0.0
  %498 = vmatmul.mubr.f32.gmra.mrb[0].mxu0 %v362
  %v499 = vpop.f32.mrb[0].mxu0
  %v500 = vadd.f32 0.0, %v499
  %v501 = vpop.f32.mrb[0].mxu0
  %502 = vdwg.mxu0
  %v503 = vmul.f32 %v430, %v430
  %v504 = vsub.f32 %v500, %v503
  %v505 = vadd.f32 %v504, 1e-05
  %v506 = vrsqrt.pop %v505
  %v508 = vrot.slane %v506, 6
  %v510 = vmul.f32 %v36, %v508
  %v511 = vlaneseq
  %v512 = vshrl.u32 %v511, 7
  %v513 = vsub.s32 0, %v512
  %v514 = vrot.slane %v430, %v513
  %v515 = vsub.f32 %v345, %v514
  %v516 = vsub.f32 %v346, %v514
  %v517 = vlaneseq
  %v518 = vshrl.u32 %v517, 7
  %v519 = vsub.s32 2, %v518
  %v520 = vrot.slane %v510, %v519
  %v521 = vmul.f32 %v515, %v520
  %v522 = vmul.f32 %v516, %v520
  %v523 = vlaneseq
  %v524 = vshrl.u32 %v523, 7
  %v525 = vsub.s32 3, %v524
  %v526 = vrot.slane %v36, %v525
  %v527 = vadd.f32 %v521, %v526
  %v528 = vadd.f32 %v522, %v526
  %v529 = vld [vmem:[%s2] sm:$0xff]
  %v530 = vld [vmem:[%s2 + $0x8] sm:$0xff]
  %v531 = vld [vmem:[%s2 + $0x10] sm:$0xff]
  %v532 = vld [vmem:[%s2 + $0x18] sm:$0xff]
  %v533 = vld [vmem:[%s2 + $0x20] sm:$0xff]
  %v534 = vld [vmem:[%s2 + $0x28] sm:$0xff]
  %v535 = vld [vmem:[%s2 + $0x30] sm:$0xff]
  %v536 = vld [vmem:[%s2 + $0x38] sm:$0xff]
  %v537 = vld [vmem:[%s2 + $0x40] sm:$0xff]
  %v538 = vld [vmem:[%s2 + $0x48] sm:$0xff]
  %v539 = vld [vmem:[%s2 + $0x50] sm:$0xff]
  %v540 = vld [vmem:[%s2 + $0x58] sm:$0xff]
  %v541 = vld [vmem:[%s2 + $0x60] sm:$0xff]
  %v542 = vld [vmem:[%s2 + $0x68] sm:$0xff]
  %v543 = vld [vmem:[%s2 + $0x70] sm:$0xff]
  %v544 = vld [vmem:[%s2 + $0x78] sm:$0xff]
  %545 = vmatprep.subr.mxu0 0.0
  %546 = vmatpush1.msra.mxu0 %v529
  %547 = vmatprep.subr.mxu0 0.0
  %548 = vmatpush1.msra.mxu0 %v530
  %549 = vmatprep.subr.mxu0 0.0
  %550 = vmatpush1.msra.mxu0 %v531
  %551 = vmatprep.subr.mxu0 0.0
  %552 = vmatpush1.msra.mxu0 %v532
  %553 = vmatprep.subr.mxu0 0.0
  %554 = vmatpush1.msra.mxu0 %v533
  %555 = vmatprep.subr.mxu0 0.0
  %556 = vmatpush1.msra.mxu0 %v534
  %557 = vmatprep.subr.mxu0 0.0
  %558 = vmatpush1.msra.mxu0 %v535
  %559 = vmatprep.subr.mxu0 0.0
  %560 = vmatpush1.msra.mxu0 %v536
  %561 = vmatprep.subr.mxu0 0.0
  %562 = vmatpush1.msra.mxu0 %v537
  %563 = vmatprep.subr.mxu0 0.0
  %564 = vmatpush1.msra.mxu0 %v538
  %565 = vmatprep.subr.mxu0 0.0
  %566 = vmatpush1.msra.mxu0 %v539
  %567 = vmatprep.subr.mxu0 0.0
  %568 = vmatpush1.msra.mxu0 %v540
  %569 = vmatprep.subr.mxu0 0.0
  %570 = vmatpush1.msra.mxu0 %v541
  %571 = vmatprep.subr.mxu0 0.0
  %572 = vmatpush1.msra.mxu0 %v542
  %573 = vmatprep.subr.mxu0 0.0
  %574 = vmatpush1.msra.mxu0 %v543
  %575 = vmatprep.subr.mxu0 0.0
  %576 = vmatpush1.msra.mxu0 %v544
  %577 = vmatprep.subr.mxu0 0.0
  %578 = vmatpush1.msra.mxu0 0.0
  %579 = vmatprep.subr.mxu0 0.0
  %580 = vmatpush1.msra.mxu0 0.0
  %581 = vmatprep.subr.mxu0 0.0
  %582 = vmatpush1.msra.mxu0 0.0
  %583 = vmatprep.subr.mxu0 0.0
  %584 = vmatpush1.msra.mxu0 0.0
  %585 = vmatprep.subr.mxu0 0.0
  %586 = vmatpush1.msra.mxu0 0.0
  %587 = vmatprep.subr.mxu0 0.0
  %588 = vmatpush1.msra.mxu0 0.0
  %589 = vmatprep.subr.mxu0 0.0
  %590 = vmatpush1.msra.mxu0 0.0
  %591 = vmatprep.subr.mxu0 0.0
  %592 = vmatpush1.msra.mxu0 0.0
  %593 = vmatprep.subr.mxu0 0.0
  %594 = vmatpush1.msra.mxu0 0.0
  %595 = vmatprep.subr.mxu0 0.0
  %596 = vmatpush1.msra.mxu0 0.0
  %597 = vmatprep.subr.mxu0 0.0
  %598 = vmatpush1.msra.mxu0 0.0
  %599 = vmatprep.subr.mxu0 0.0
  %600 = vmatpush1.msra.mxu0 0.0
  %601 = vmatprep.subr.mxu0 0.0
  %602 = vmatpush1.msra.mxu0 0.0
  %603 = vmatprep.subr.mxu0 0.0
  %604 = vmatpush1.msra.mxu0 0.0
  %605 = vmatprep.subr.mxu0 0.0
  %606 = vmatpush1.msra.mxu0 0.0
  %607 = vmatprep.subr.mxu0 0.0
  %608 = vmatpush1.msra.mxu0 0.0
  %609 = vmatprep.mubr.f32.mxu0 0.0
  %610 = vmatmul.mubr.f32.gmra.mrb[0].mxu0 %v527
  %v611 = vpop.f32.mrb[0].mxu0
  %v612 = vadd.f32 0.0, %v611
  %v613 = vpop.f32.mrb[0].mxu0
  %614 = vmatprep.mubr.f32.mxu0 0.0
  %615 = vmatmul.mubr.f32.gmra.mrb[0].mxu0 %v528
  %v616 = vpop.f32.mrb[0].mxu0
  %v617 = vadd.f32 0.0, %v616
  %v618 = vpop.f32.mrb[0].mxu0
  %619 = vdwg.mxu0
  %s620 = scalar_lea.vmem %s2, 128
  %v621 = vld [vmem:[%s620] sm:$0xff]
  %v622 = vld [vmem:[%s620 + $0x8] sm:$0xff]
  %v623 = vld [vmem:[%s620 + $0x10] sm:$0xff]
  %v624 = vld [vmem:[%s620 + $0x18] sm:$0xff]
  %v625 = vld [vmem:[%s620 + $0x20] sm:$0xff]
  %v626 = vld [vmem:[%s620 + $0x28] sm:$0xff]
  %v627 = vld [vmem:[%s620 + $0x30] sm:$0xff]
  %v628 = vld [vmem:[%s620 + $0x38] sm:$0xff]
  %v629 = vld [vmem:[%s620 + $0x40] sm:$0xff]
  %v630 = vld [vmem:[%s620 + $0x48] sm:$0xff]
  %v631 = vld [vmem:[%s620 + $0x50] sm:$0xff]
  %v632 = vld [vmem:[%s620 + $0x58] sm:$0xff]
  %v633 = vld [vmem:[%s620 + $0x60] sm:$0xff]
  %v634 = vld [vmem:[%s620 + $0x68] sm:$0xff]
  %v635 = vld [vmem:[%s620 + $0x70] sm:$0xff]
  %v636 = vld [vmem:[%s620 + $0x78] sm:$0xff]
  %637 = vmatprep.subr.mxu0 0.0
  %638 = vmatpush1.msra.mxu0 %v621
  %639 = vmatprep.subr.mxu0 0.0
  %640 = vmatpush1.msra.mxu0 %v622
  %641 = vmatprep.subr.mxu0 0.0
  %642 = vmatpush1.msra.mxu0 %v623
  %643 = vmatprep.subr.mxu0 0.0
  %644 = vmatpush1.msra.mxu0 %v624
  %645 = vmatprep.subr.mxu0 0.0
  %646 = vmatpush1.msra.mxu0 %v625
  %647 = vmatprep.subr.mxu0 0.0
  %648 = vmatpush1.msra.mxu0 %v626
  %649 = vmatprep.subr.mxu0 0.0
  %650 = vmatpush1.msra.mxu0 %v627
  %651 = vmatprep.subr.mxu0 0.0
  %652 = vmatpush1.msra.mxu0 %v628
  %653 = vmatprep.subr.mxu0 0.0
  %654 = vmatpush1.msra.mxu0 %v629
  %655 = vmatprep.subr.mxu0 0.0
  %656 = vmatpush1.msra.mxu0 %v630
  %657 = vmatprep.subr.mxu0 0.0
  %658 = vmatpush1.msra.mxu0 %v631
  %659 = vmatprep.subr.mxu0 0.0
  %660 = vmatpush1.msra.mxu0 %v632
  %661 = vmatprep.subr.mxu0 0.0
  %662 = vmatpush1.msra.mxu0 %v633
  %663 = vmatprep.subr.mxu0 0.0
  %664 = vmatpush1.msra.mxu0 %v634
  %665 = vmatprep.subr.mxu0 0.0
  %666 = vmatpush1.msra.mxu0 %v635
  %667 = vmatprep.subr.mxu0 0.0
  %668 = vmatpush1.msra.mxu0 %v636
  %669 = vmatprep.subr.mxu0 0.0
  %670 = vmatpush1.msra.mxu0 0.0
  %671 = vmatprep.subr.mxu0 0.0
  %672 = vmatpush1.msra.mxu0 0.0
  %673 = vmatprep.subr.mxu0 0.0
  %674 = vmatpush1.msra.mxu0 0.0
  %675 = vmatprep.subr.mxu0 0.0
  %676 = vmatpush1.msra.mxu0 0.0
  %677 = vmatprep.subr.mxu0 0.0
  %678 = vmatpush1.msra.mxu0 0.0
  %679 = vmatprep.subr.mxu0 0.0
  %680 = vmatpush1.msra.mxu0 0.0
  %681 = vmatprep.subr.mxu0 0.0
  %682 = vmatpush1.msra.mxu0 0.0
  %683 = vmatprep.subr.mxu0 0.0
  %684 = vmatpush1.msra.mxu0 0.0
  %685 = vmatprep.subr.mxu0 0.0
  %686 = vmatpush1.msra.mxu0 0.0
  %687 = vmatprep.subr.mxu0 0.0
  %688 = vmatpush1.msra.mxu0 0.0
  %689 = vmatprep.subr.mxu0 0.0
  %690 = vmatpush1.msra.mxu0 0.0
  %691 = vmatprep.subr.mxu0 0.0
  %692 = vmatpush1.msra.mxu0 0.0
  %693 = vmatprep.subr.mxu0 0.0
  %694 = vmatpush1.msra.mxu0 0.0
  %695 = vmatprep.subr.mxu0 0.0
  %696 = vmatpush1.msra.mxu0 0.0
  %697 = vmatprep.subr.mxu0 0.0
  %698 = vmatpush1.msra.mxu0 0.0
  %699 = vmatprep.subr.mxu0 0.0
  %700 = vmatpush1.msra.mxu0 0.0
  %701 = vmatprep.mubr.f32.mxu0 0.0
  %702 = vmatmul.mubr.f32.gmra.mrb[0].mxu0 %v527
  %v703 = vpop.f32.mrb[0].mxu0
  %v704 = vadd.f32 0.0, %v703
  %v705 = vpop.f32.mrb[0].mxu0
  %706 = vmatprep.mubr.f32.mxu0 0.0
  %707 = vmatmul.mubr.f32.gmra.mrb[0].mxu0 %v528
  %v708 = vpop.f32.mrb[0].mxu0
  %v709 = vadd.f32 0.0, %v708
  %v710 = vpop.f32.mrb[0].mxu0
  %711 = vdwg.mxu0
  %s712 = scalar_lea.vmem %s2, 256
  %v713 = vld [vmem:[%s712] sm:$0xff]
  %v714 = vld [vmem:[%s712 + $0x8] sm:$0xff]
  %v715 = vld [vmem:[%s712 + $0x10] sm:$0xff]
  %v716 = vld [vmem:[%s712 + $0x18] sm:$0xff]
  %v717 = vld [vmem:[%s712 + $0x20] sm:$0xff]
  %v718 = vld [vmem:[%s712 + $0x28] sm:$0xff]
  %v719 = vld [vmem:[%s712 + $0x30] sm:$0xff]
  %v720 = vld [vmem:[%s712 + $0x38] sm:$0xff]
  %v721 = vld [vmem:[%s712 + $0x40] sm:$0xff]
  %v722 = vld [vmem:[%s712 + $0x48] sm:$0xff]
  %v723 = vld [vmem:[%s712 + $0x50] sm:$0xff]
  %v724 = vld [vmem:[%s712 + $0x58] sm:$0xff]
  %v725 = vld [vmem:[%s712 + $0x60] sm:$0xff]
  %v726 = vld [vmem:[%s712 + $0x68] sm:$0xff]
  %v727 = vld [vmem:[%s712 + $0x70] sm:$0xff]
  %v728 = vld [vmem:[%s712 + $0x78] sm:$0xff]
  %729 = vmatprep.subr.mxu0 0.0
  %730 = vmatpush1.msra.mxu0 %v713
  %731 = vmatprep.subr.mxu0 0.0
  %732 = vmatpush1.msra.mxu0 %v714
  %733 = vmatprep.subr.mxu0 0.0
  %734 = vmatpush1.msra.mxu0 %v715
  %735 = vmatprep.subr.mxu0 0.0
  %736 = vmatpush1.msra.mxu0 %v716
  %737 = vmatprep.subr.mxu0 0.0
  %738 = vmatpush1.msra.mxu0 %v717
  %739 = vmatprep.subr.mxu0 0.0
  %740 = vmatpush1.msra.mxu0 %v718
  %741 = vmatprep.subr.mxu0 0.0
  %742 = vmatpush1.msra.mxu0 %v719
  %743 = vmatprep.subr.mxu0 0.0
  %744 = vmatpush1.msra.mxu0 %v720
  %745 = vmatprep.subr.mxu0 0.0
  %746 = vmatpush1.msra.mxu0 %v721
  %747 = vmatprep.subr.mxu0 0.0
  %748 = vmatpush1.msra.mxu0 %v722
  %749 = vmatprep.subr.mxu0 0.0
  %750 = vmatpush1.msra.mxu0 %v723
  %751 = vmatprep.subr.mxu0 0.0
  %752 = vmatpush1.msra.mxu0 %v724
  %753 = vmatprep.subr.mxu0 0.0
  %754 = vmatpush1.msra.mxu0 %v725
  %755 = vmatprep.subr.mxu0 0.0
  %756 = vmatpush1.msra.mxu0 %v726
  %757 = vmatprep.subr.mxu0 0.0
  %758 = vmatpush1.msra.mxu0 %v727
  %759 = vmatprep.subr.mxu0 0.0
  %760 = vmatpush1.msra.mxu0 %v728
  %761 = vmatprep.subr.mxu0 0.0
  %762 = vmatpush1.msra.mxu0 0.0
  %763 = vmatprep.subr.mxu0 0.0
  %764 = vmatpush1.msra.mxu0 0.0
  %765 = vmatprep.subr.mxu0 0.0
  %766 = vmatpush1.msra.mxu0 0.0
  %767 = vmatprep.subr.mxu0 0.0
  %768 = vmatpush1.msra.mxu0 0.0
  %769 = vmatprep.subr.mxu0 0.0
  %770 = vmatpush1.msra.mxu0 0.0
  %771 = vmatprep.subr.mxu0 0.0
  %772 = vmatpush1.msra.mxu0 0.0
  %773 = vmatprep.subr.mxu0 0.0
  %774 = vmatpush1.msra.mxu0 0.0
  %775 = vmatprep.subr.mxu0 0.0
  %776 = vmatpush1.msra.mxu0 0.0
  %777 = vmatprep.subr.mxu0 0.0
  %778 = vmatpush1.msra.mxu0 0.0
  %779 = vmatprep.subr.mxu0 0.0
  %780 = vmatpush1.msra.mxu0 0.0
  %781 = vmatprep.subr.mxu0 0.0
  %782 = vmatpush1.msra.mxu0 0.0
  %783 = vmatprep.subr.mxu0 0.0
  %784 = vmatpush1.msra.mxu0 0.0
  %785 = vmatprep.subr.mxu0 0.0
  %786 = vmatpush1.msra.mxu0 0.0
  %787 = vmatprep.subr.mxu0 0.0
  %788 = vmatpush1.msra.mxu0 0.0
  %789 = vmatprep.subr.mxu0 0.0
  %790 = vmatpush1.msra.mxu0 0.0
  %791 = vmatprep.subr.mxu0 0.0
  %792 = vmatpush1.msra.mxu0 0.0
  %793 = vmatprep.mubr.f32.mxu0 0.0
  %794 = vmatmul.mubr.f32.gmra.mrb[0].mxu0 %v527
  %v795 = vpop.f32.mrb[0].mxu0
  %v796 = vadd.f32 0.0, %v795
  %v797 = vpop.f32.mrb[0].mxu0
  %798 = vmatprep.mubr.f32.mxu0 0.0
  %799 = vmatmul.mubr.f32.gmra.mrb[0].mxu0 %v528
  %v800 = vpop.f32.mrb[0].mxu0
  %v801 = vadd.f32 0.0, %v800
  %v802 = vpop.f32.mrb[0].mxu0
  %803 = vdwg.mxu0
  %v804 = vrot.slane %v612, 7
  %v805 = vrot.slane %v617, 7
  %v806 = vsel %vm323, %v804, %v805
  %v807 = vsel %vm323, %v805, %v804
  %v808 = vsel %vm40, 0.0, %v807
  %v809 = vsel %vm41, 0.0, %v806
  %v810 = vrot.slane %v796, 1
  %v811 = vrot.slane %v801, 1
  %v812 = vsel %vm330, %v810, %v811
  %v813 = vsel %vm330, %v811, %v810
  %v814 = vsel %vm42, 0.0, %v812
  %v815 = vsel %vm43, 0.0, %v813
  %v816 = vadd.f32 %v808, %v704
  %v817 = vadd.f32 %v809, %v709
  %v818 = vadd.f32 %v816, %v814
  %v819 = vadd.f32 %v817, %v815
  %v820 = vlaneseq
  %v821 = vshrl.u32 %v820, 7
  %v822 = vsub.s32 1, %v821
  %v823 = vrot.slane %v36, %v822
  %v824 = vadd.f32 %v818, %v823
  %v825 = vadd.f32 %v819, %v823
  %v826 = vadd.f32 %v824, %v44
  %v827 = vadd.f32 %v825, %v45
  %v828 = vmax.f32 %v826, 0.0
  %v829 = vmax.f32 %v827, 0.0
  %v830 = vadd.f32 %v828, %v829
  %v831 = vrot.slane %v830, 4
  %v832 = vadd.f32 %v830, %v831
  %v833 = vrot.slane %v832, 2
  %v834 = vadd.f32 %v832, %v833
  %v835 = vrot.slane %v834, 1
  %v836 = vadd.f32 %v834, %v835
  %v837 = vmul.f32 %v828, %v828
  %v838 = vmul.f32 %v829, %v829
  %v839 = vadd.f32 %v837, %v838
  %v840 = vrot.slane %v839, 4
  %v841 = vadd.f32 %v839, %v840
  %v842 = vrot.slane %v841, 2
  %v843 = vadd.f32 %v841, %v842
  %v844 = vrot.slane %v843, 1
  %v845 = vadd.f32 %v843, %v844
  %846 = vmatprep.subr.mxu0 0.0
  %847 = vmatpush1.msra.mxu0 %v20
  %848 = vmatprep.subr.mxu0 0.0
  %849 = vmatpush1.msra.mxu0 %v21
  %850 = vmatprep.subr.mxu0 0.0
  %851 = vmatpush1.msra.mxu0 %v22
  %852 = vmatprep.subr.mxu0 0.0
  %853 = vmatpush1.msra.mxu0 %v23
  %854 = vmatprep.subr.mxu0 0.0
  %855 = vmatpush1.msra.mxu0 %v24
  %856 = vmatprep.subr.mxu0 0.0
  %857 = vmatpush1.msra.mxu0 %v25
  %858 = vmatprep.subr.mxu0 0.0
  %859 = vmatpush1.msra.mxu0 %v26
  %860 = vmatprep.subr.mxu0 0.0
  %861 = vmatpush1.msra.mxu0 %v27
  %862 = vmatprep.subr.mxu0 0.0
  %863 = vmatpush1.msra.mxu0 %v28
  %864 = vmatprep.subr.mxu0 0.0
  %865 = vmatpush1.msra.mxu0 %v29
  %866 = vmatprep.subr.mxu0 0.0
  %867 = vmatpush1.msra.mxu0 %v30
  %868 = vmatprep.subr.mxu0 0.0
  %869 = vmatpush1.msra.mxu0 %v31
  %870 = vmatprep.subr.mxu0 0.0
  %871 = vmatpush1.msra.mxu0 %v32
  %872 = vmatprep.subr.mxu0 0.0
  %873 = vmatpush1.msra.mxu0 %v33
  %874 = vmatprep.subr.mxu0 0.0
  %875 = vmatpush1.msra.mxu0 %v34
  %876 = vmatprep.subr.mxu0 0.0
  %877 = vmatpush1.msra.mxu0 %v35
  %878 = vmatprep.subr.mxu0 0.0
  %879 = vmatpush1.msra.mxu0 0.0
  %880 = vmatprep.subr.mxu0 0.0
  %881 = vmatpush1.msra.mxu0 0.0
  %882 = vmatprep.subr.mxu0 0.0
  %883 = vmatpush1.msra.mxu0 0.0
  %884 = vmatprep.subr.mxu0 0.0
  %885 = vmatpush1.msra.mxu0 0.0
  %886 = vmatprep.subr.mxu0 0.0
  %887 = vmatpush1.msra.mxu0 0.0
  %888 = vmatprep.subr.mxu0 0.0
  %889 = vmatpush1.msra.mxu0 0.0
  %890 = vmatprep.subr.mxu0 0.0
  %891 = vmatpush1.msra.mxu0 0.0
  %892 = vmatprep.subr.mxu0 0.0
  %893 = vmatpush1.msra.mxu0 0.0
  %894 = vmatprep.subr.mxu0 0.0
  %895 = vmatpush1.msra.mxu0 0.0
  %896 = vmatprep.subr.mxu0 0.0
  %897 = vmatpush1.msra.mxu0 0.0
  %898 = vmatprep.subr.mxu0 0.0
  %899 = vmatpush1.msra.mxu0 0.0
  %900 = vmatprep.subr.mxu0 0.0
  %901 = vmatpush1.msra.mxu0 0.0
  %902 = vmatprep.subr.mxu0 0.0
  %903 = vmatpush1.msra.mxu0 0.0
  %904 = vmatprep.subr.mxu0 0.0
  %905 = vmatpush1.msra.mxu0 0.0
  %906 = vmatprep.subr.mxu0 0.0
  %907 = vmatpush1.msra.mxu0 0.0
  %908 = vmatprep.subr.mxu0 0.0
  %909 = vmatpush1.msra.mxu0 0.0
  %910 = vmatprep.mubr.f32.mxu0 0.0
  %911 = vmatmul.mubr.f32.gmra.mrb[0].mxu0 %v836
  %v912 = vpop.f32.mrb[0].mxu0
  %v913 = vadd.f32 0.0, %v912
  %v914 = vpop.f32.mrb[0].mxu0
  %915 = vdwg.mxu0
  %916 = vmatprep.subr.mxu0 0.0
  %917 = vmatpush1.msra.mxu0 %v20
  %918 = vmatprep.subr.mxu0 0.0
  %919 = vmatpush1.msra.mxu0 %v21
  %920 = vmatprep.subr.mxu0 0.0
  %921 = vmatpush1.msra.mxu0 %v22
  %922 = vmatprep.subr.mxu0 0.0
  %923 = vmatpush1.msra.mxu0 %v23
  %924 = vmatprep.subr.mxu0 0.0
  %925 = vmatpush1.msra.mxu0 %v24
  %926 = vmatprep.subr.mxu0 0.0
  %927 = vmatpush1.msra.mxu0 %v25
  %928 = vmatprep.subr.mxu0 0.0
  %929 = vmatpush1.msra.mxu0 %v26
  %930 = vmatprep.subr.mxu0 0.0
  %931 = vmatpush1.msra.mxu0 %v27
  %932 = vmatprep.subr.mxu0 0.0
  %933 = vmatpush1.msra.mxu0 %v28
  %934 = vmatprep.subr.mxu0 0.0
  %935 = vmatpush1.msra.mxu0 %v29
  %936 = vmatprep.subr.mxu0 0.0
  %937 = vmatpush1.msra.mxu0 %v30
  %938 = vmatprep.subr.mxu0 0.0
  %939 = vmatpush1.msra.mxu0 %v31
  %940 = vmatprep.subr.mxu0 0.0
  %941 = vmatpush1.msra.mxu0 %v32
  %942 = vmatprep.subr.mxu0 0.0
  %943 = vmatpush1.msra.mxu0 %v33
  %944 = vmatprep.subr.mxu0 0.0
  %945 = vmatpush1.msra.mxu0 %v34
  %946 = vmatprep.subr.mxu0 0.0
  %947 = vmatpush1.msra.mxu0 %v35
  %948 = vmatprep.subr.mxu0 0.0
  %949 = vmatpush1.msra.mxu0 0.0
  %950 = vmatprep.subr.mxu0 0.0
  %951 = vmatpush1.msra.mxu0 0.0
  %952 = vmatprep.subr.mxu0 0.0
  %953 = vmatpush1.msra.mxu0 0.0
  %954 = vmatprep.subr.mxu0 0.0
  %955 = vmatpush1.msra.mxu0 0.0
  %956 = vmatprep.subr.mxu0 0.0
  %957 = vmatpush1.msra.mxu0 0.0
  %958 = vmatprep.subr.mxu0 0.0
  %959 = vmatpush1.msra.mxu0 0.0
  %960 = vmatprep.subr.mxu0 0.0
  %961 = vmatpush1.msra.mxu0 0.0
  %962 = vmatprep.subr.mxu0 0.0
  %963 = vmatpush1.msra.mxu0 0.0
  %964 = vmatprep.subr.mxu0 0.0
  %965 = vmatpush1.msra.mxu0 0.0
  %966 = vmatprep.subr.mxu0 0.0
  %967 = vmatpush1.msra.mxu0 0.0
  %968 = vmatprep.subr.mxu0 0.0
  %969 = vmatpush1.msra.mxu0 0.0
  %970 = vmatprep.subr.mxu0 0.0
  %971 = vmatpush1.msra.mxu0 0.0
  %972 = vmatprep.subr.mxu0 0.0
  %973 = vmatpush1.msra.mxu0 0.0
  %974 = vmatprep.subr.mxu0 0.0
  %975 = vmatpush1.msra.mxu0 0.0
  %976 = vmatprep.subr.mxu0 0.0
  %977 = vmatpush1.msra.mxu0 0.0
  %978 = vmatprep.subr.mxu0 0.0
  %979 = vmatpush1.msra.mxu0 0.0
  %980 = vmatprep.mubr.f32.mxu0 0.0
  %981 = vmatmul.mubr.f32.gmra.mrb[0].mxu0 %v845
  %v982 = vpop.f32.mrb[0].mxu0
  %v983 = vadd.f32 0.0, %v982
  %v984 = vpop.f32.mrb[0].mxu0
  %985 = vdwg.mxu0
  %v986 = vmul.f32 %v913, %v913
  %v987 = vsub.f32 %v983, %v986
  %v988 = vadd.f32 %v987, 1e-05
  %v989 = vrsqrt.pop %v988
  %v991 = vrot.slane %v989, 4
  %v993 = vmul.f32 %v36, %v991
  %v994 = vlaneseq
  %v995 = vshrl.u32 %v994, 7
  %v996 = vsub.s32 0, %v995
  %v997 = vrot.slane %v913, %v996
  %v998 = vsub.f32 %v828, %v997
  %v999 = vsub.f32 %v829, %v997
  %v1000 = vlaneseq
  %v1001 = vshrl.u32 %v1000, 7
  %v1002 = vsub.s32 4, %v1001
  %v1003 = vrot.slane %v993, %v1002
  %v1004 = vmul.f32 %v998, %v1003
  %v1005 = vmul.f32 %v999, %v1003
  %v1006 = vlaneseq
  %v1007 = vshrl.u32 %v1006, 7
  %v1008 = vsub.s32 5, %v1007
  %v1009 = vrot.slane %v36, %v1008
  %v1010 = vadd.f32 %v1004, %v1009
  %v1011 = vadd.f32 %v1005, %v1009
  %1012 = vst [vmem:[%s5] sm:$0xff] %v1010
  %1013 = vst [vmem:[%s5 + $0x8] sm:$0xff] %v1011
  // Predicated region
  $region22: #{resblock_forward.1} parent=0 // pred_check
    _
  $region23: #{resblock_forward.1} parent=0 // pred_check_branch
    %1015 = sbr.rel (0) target = $region25
  $region24: #{resblock_forward.1} parent=0 // pred_region
    _
  $region25: #{resblock_forward.1} parent=0 // pred_fallthru
    _
  // Predicated region
  $region26: #{resblock_forward.1} parent=0 // pred_check
    _
  $region27: #{resblock_forward.1} parent=0 // pred_check_branch
    %1017 = sbr.rel (0) target = $region29
  $region28: #{resblock_forward.1} parent=0 // pred_region
    _
  $region29: #{resblock_forward.1} parent=0 // pred_fallthru
    _

</llo_original>
